<compile_context>
chip_gen: v7x
topology: tpu7x:2x2x1
jax: 0.10.0
libtpu: 0.0.40
codegen_flags: <defaults>
</compile_context>

<pallas_src>
import functools

import jax
import jax.numpy as jnp
from jax.experimental import pallas as pl
from jax.experimental.pallas import tpu as pltpu


def _cdiv(a, b):
    return (a + b - 1) // b


def _round_up(n, m):
    return ((n + m - 1) // m) * m


def _act_dtype_for_device():
    """bf16 elementwise epilogue on v6e/v7x; f32 on v5e/v5p/v4/unknown."""
    try:
        kind = jax.devices()[0].device_kind.lower()
    except Exception:
        return jnp.float32
    if ("v6" in kind) or ("v7" in kind) or ("7x" in kind):
        return jnp.bfloat16
    return jnp.float32


def _mish(x_f32, act_dtype):
    # mish(x) = x * tanh(softplus(x)) = x * e*(e+2) / (e*(e+2) + 2), e = exp(x).
    # One EUP exp + one EUP approx reciprocal; large-x passthrough keeps it
    # numerically stable.  Polynomial part runs in act_dtype (bf16 on v6e/v7x,
    # f32 on v5e which has no bf16 VPU/EUP); the approx reciprocal stays f32
    # for a guaranteed lowering (casts are cheap VPU ops).
    x = x_f32.astype(act_dtype)
    e = jnp.exp(jnp.minimum(x, 20.0))
    num = e * (e + 2.0)
    inv = pl.reciprocal(num.astype(jnp.float32) + 2.0, approx=True)
    y = x * num * inv.astype(act_dtype)
    return jnp.where(x > 20.0, x, y)


def _critic_v_kernel(x_ref, w1_ref, b1_ref, w2_ref, b2_ref, w3_ref, b3_ref,
                     o_ref, *, act_dtype):
    # Layer 1: bf16 MXU matmul, f32 accumulation, Mish in act_dtype.
    xb = x_ref[...].astype(jnp.bfloat16)
    h1 = jnp.dot(xb, w1_ref[...], preferred_element_type=jnp.float32)
    h1 = _mish(h1 + b1_ref[...], act_dtype)                   # [TB, H]

    # Layer 2: bf16 MXU matmul, f32 accumulation, Mish in act_dtype.
    h2 = jnp.dot(h1.astype(jnp.bfloat16), w2_ref[...],
                 preferred_element_type=jnp.float32)
    h2 = _mish(h2 + b2_ref[...], act_dtype)                    # [TB, H]

    # Layer 3 (hidden -> 1): VPU multiply + XLU lane reduction (f32 accumulate)
    # instead of an N=1 MXU pass; b3 is an SMEM scalar.
    prod = (h2 * w3_ref[...].astype(act_dtype)).astype(jnp.float32)
    val = jnp.sum(prod, axis=-1, keepdims=True) + b3_ref[0]    # [TB, 1]
    o_ref[...] = val.astype(o_ref.dtype)


@functools.partial(jax.jit, static_argnames=("block_batch",))
def critic_v_pallas(x, w1, b1, w2, b2, w3, b3, block_batch=1024):
    """x: [batch, state_dim] f32; weights stored [in, out]; returns [batch, 1]."""
    batch, state_dim = x.shape
    hidden = w1.shape[1]
    act_dtype = _act_dtype_for_device()

    # Batch tile: multiple of 8 sublanes; large tiles amortize the ~0.35 us
    # per-grid-step overhead (VMEM usage stays well under limits at tb=1024).
    tb = min(block_batch, _round_up(batch, 8))
    # Ensure >= 2 grid steps when there is enough work, so that
    # dimension_semantics=("parallel",) shards the batch over v7x's two TCs.
    if batch >= 16:
        tb = min(tb, _round_up(_cdiv(batch, 2), 8))
    grid = (_cdiv(batch, tb),)   # partial last block allowed; no host-side pad

    # bf16 weights halve HBM->VMEM traffic; biases stay f32; b3 is one scalar.
    w1b = w1.astype(jnp.bfloat16)
    w2b = w2.astype(jnp.bfloat16)
    w3t = w3.reshape(1, hidden).astype(jnp.bfloat16)
    b1r = b1.reshape(1, hidden).astype(jnp.float32)
    b2r = b2.reshape(1, hidden).astype(jnp.float32)
    b3s = b3.reshape(1).astype(jnp.float32)

    # Weights/biases: constant block index across the grid -> VMEM-resident.
    def const(shape):
        return pl.BlockSpec(shape, lambda i: (0, 0))

    out = pl.pallas_call(
        functools.partial(_critic_v_kernel, act_dtype=act_dtype),
        out_shape=jax.ShapeDtypeStruct((batch, 1), jnp.float32),
        grid=grid,
        in_specs=[
            pl.BlockSpec((tb, state_dim), lambda i: (i, 0)),      # x tile
            const((state_dim, hidden)),                           # w1
            const((1, hidden)),                                   # b1
            const((hidden, hidden)),                              # w2
            const((1, hidden)),                                   # b2
            const((1, hidden)),                                   # w3 (row)
            pl.BlockSpec(memory_space=pltpu.MemorySpace.SMEM),    # b3 scalar
        ],
        out_specs=pl.BlockSpec((tb, 1), lambda i: (i, 0)),
        compiler_params=pltpu.CompilerParams(
            dimension_semantics=("parallel",)),
    )(x, w1b, b1r, w2b, b2r, w3t, b3s)

    return out


def obs_processor(obs, window_size):
    """Pure-JAX glue replicating ObsProcessor(lstm=False).forward."""
    # TODO(synk): the use_lstm=True branch (nn.LSTM over window features) is
    # not implemented; the module default LSTM=False drops those features.
    features = []
    for key in sorted(obs.keys()):
        v = obs[key]
        if v.ndim == 3 and v.shape[-1] == window_size:
            continue  # window features are dropped when LSTM=False
        features.append(v[..., None].astype(jnp.float32))
    final = jnp.concatenate(features, axis=-1)        # [B, clients, n_feat]
    return final.reshape(final.shape[0], -1)          # [B, clients * n_feat]


def init_linear_params(key, fan_in, fan_out):
    """Deterministic init mimicking nn.Linear (uniform +-1/sqrt(fan_in))."""
    k_w, k_b = jax.random.split(key)
    bound = 1.0 / jnp.sqrt(jnp.float32(fan_in))
    # Stored as [in, out] (transposed vs. PyTorch's [out, in]).
    w = jax.random.uniform(k_w, (fan_in, fan_out), jnp.float32, -bound, bound)
    b = jax.random.uniform(k_b, (1, fan_out), jnp.float32, -bound, bound)
    return w, b


def critic_v_reference(x, w1, b1, w2, b2, w3, b3):
    def mish(v):
        return v * jnp.tanh(jax.nn.softplus(v))
    h1 = mish(x @ w1 + b1)
    h2 = mish(h1 @ w2 + b2)
    return h2 @ w3 + b3


if __name__ == "__main__":
    # Small, module-consistent shapes.
    batch = 2
    clients = 4
    window_size = 5
    hidden_dim = 256  # q_net default width

    key = jax.random.PRNGKey(0)
    k_obs_a, k_obs_b, k_obs_w, k1, k2, k3 = jax.random.split(key, 6)

    # Observation dict: two scalar-per-client features + one window feature
    # (the window feature is skipped when LSTM=False, matching PyTorch).
    obs = {
        "cpu": jax.random.normal(k_obs_a, (batch, clients), jnp.float32),
        "mem": jax.random.normal(k_obs_b, (batch, clients), jnp.float32),
        "rate_hist": jax.random.normal(
            k_obs_w, (batch, clients, window_size), jnp.float32),
    }

    x = obs_processor(obs, window_size)               # [batch, clients * 2]
    state_dim = x.shape[-1]                           # = 8

    w1, b1 = init_linear_params(k1, state_dim, hidden_dim)
    w2, b2 = init_linear_params(k2, hidden_dim, hidden_dim)
    w3, b3 = init_linear_params(k3, hidden_dim, 1)

    out = critic_v_pallas(x, w1, b1, w2, b2, w3, b3)
    out = jax.block_until_ready(out)

    # Reference uses the same bf16-rounded weights (upcast to f32); remaining
    # differences are bf16 MXU inputs, (possibly) bf16 Mish on v6e/v7x, the
    # approximate reciprocal, and accumulation order.
    w1q = w1.astype(jnp.bfloat16).astype(jnp.float32)
    w2q = w2.astype(jnp.bfloat16).astype(jnp.float32)
    w3q = w3.astype(jnp.bfloat16).astype(jnp.float32)
    ref = critic_v_reference(x, w1q, b1, w2q, b2, w3q, b3)

    assert out.shape == (batch, 1)
    assert jnp.allclose(out, ref, atol=3e-2, rtol=3e-2), (out, ref)

    print("KERNEL_OK")
</pallas_src>

<mosaic_0001>
module attributes {stable_mosaic.version = 11 : i64} {
  func.func @_critic_v_kernel(%arg0: i32, %arg1: memref<8x8xf32, #tpu.memory_space<vmem>>, %arg2: memref<8x256xbf16, #tpu.memory_space<vmem>>, %arg3: memref<1x256xf32, #tpu.memory_space<vmem>>, %arg4: memref<256x256xbf16, #tpu.memory_space<vmem>>, %arg5: memref<1x256xf32, #tpu.memory_space<vmem>>, %arg6: memref<1x256xbf16, #tpu.memory_space<vmem>>, %arg7: memref<1xf32, #tpu.memory_space<smem>>, %arg8: memref<8x1xf32, #tpu.memory_space<vmem>>) attributes {dimension_semantics = [#tpu.dimension_semantics<parallel>], iteration_bounds = array<i64: 1>, scalar_prefetch = 0 : i64, scratch_operands = 0 : i64, tpu.core_type = #tpu.core_type<tc>, window_params = [{transform_indices = @transform_0, window_bounds = array<i64: 8, 8>}, {pipeline_mode = #tpu.pipeline_mode<synchronous>, transform_indices = @transform_1, window_bounds = array<i64: 8, 256>}, {pipeline_mode = #tpu.pipeline_mode<synchronous>, transform_indices = @transform_2, window_bounds = array<i64: 1, 256>}, {pipeline_mode = #tpu.pipeline_mode<synchronous>, transform_indices = @transform_3, window_bounds = array<i64: 256, 256>}, {pipeline_mode = #tpu.pipeline_mode<synchronous>, transform_indices = @transform_4, window_bounds = array<i64: 1, 256>}, {pipeline_mode = #tpu.pipeline_mode<synchronous>, transform_indices = @transform_5, window_bounds = array<i64: 1, 256>}, {transform_indices = @transform_6, window_bounds = array<i64: 1>}, {transform_indices = @transform_7, window_bounds = array<i64: 8, 1>}]} {
    %c0 = arith.constant 0 : index
    %c0_0 = arith.constant 0 : index
    %0 = vector.load %arg1[%c0, %c0_0] : memref<8x8xf32, #tpu.memory_space<vmem>>, vector<8x8xf32>
    %1 = arith.truncf %0 : vector<8x8xf32> to vector<8x8xbf16>
    %c0_1 = arith.constant 0 : index
    %c0_2 = arith.constant 0 : index
    %2 = vector.load %arg2[%c0_1, %c0_2] : memref<8x256xbf16, #tpu.memory_space<vmem>>, vector<8x256xbf16>
    %cst = arith.constant dense<0.000000e+00> : vector<8x256xf32>
    %3 = tpu.matmul %1, %2, %cst {dimension_numbers = #tpu.dot_dimension_numbers<[1], [0], [0], [1], [0, 0, 1, 1], [], []>} : vector<8x8xbf16>, vector<8x256xbf16>, vector<8x256xf32> -> vector<8x256xf32>
    %c0_3 = arith.constant 0 : index
    %c0_4 = arith.constant 0 : index
    %4 = vector.load %arg3[%c0_3, %c0_4] : memref<1x256xf32, #tpu.memory_space<vmem>>, vector<1x256xf32>
    %5 = vector.broadcast %4 : vector<1x256xf32> to vector<8x256xf32>
    %6 = arith.addf %3, %5 : vector<8x256xf32>
    %cst_5 = arith.constant 2.000000e+01 : f32
    %7 = vector.broadcast %cst_5 : f32 to vector<8x256xf32>
    %8 = arith.minimumf %6, %7 : vector<8x256xf32>
    %9 = math.exp %8 : vector<8x256xf32>
    %cst_6 = arith.constant 2.000000e+00 : f32
    %10 = vector.broadcast %cst_6 : f32 to vector<8x256xf32>
    %11 = arith.addf %9, %10 : vector<8x256xf32>
    %12 = arith.mulf %9, %11 : vector<8x256xf32>
    %cst_7 = arith.constant 2.000000e+00 : f32
    %13 = vector.broadcast %cst_7 : f32 to vector<8x256xf32>
    %14 = arith.addf %12, %13 : vector<8x256xf32>
    %15 = tpu.reciprocal %14 {approx = true} : vector<8x256xf32> -> vector<8x256xf32>
    %16 = arith.mulf %6, %12 : vector<8x256xf32>
    %17 = arith.mulf %16, %15 : vector<8x256xf32>
    %cst_8 = arith.constant 2.000000e+01 : f32
    %18 = vector.broadcast %cst_8 : f32 to vector<8x256xf32>
    %19 = arith.cmpf ogt, %6, %18 : vector<8x256xf32>
    %20 = arith.select %19, %6, %17 : vector<8x256xi1>, vector<8x256xf32>
    %21 = arith.truncf %20 : vector<8x256xf32> to vector<8x256xbf16>
    %c0_9 = arith.constant 0 : index
    %c0_10 = arith.constant 0 : index
    %22 = vector.load %arg4[%c0_9, %c0_10] : memref<256x256xbf16, #tpu.memory_space<vmem>>, vector<256x256xbf16>
    %cst_11 = arith.constant dense<0.000000e+00> : vector<8x256xf32>
    %23 = tpu.matmul %21, %22, %cst_11 {dimension_numbers = #tpu.dot_dimension_numbers<[1], [0], [0], [1], [0, 0, 1, 1], [], []>} : vector<8x256xbf16>, vector<256x256xbf16>, vector<8x256xf32> -> vector<8x256xf32>
    %c0_12 = arith.constant 0 : index
    %c0_13 = arith.constant 0 : index
    %24 = vector.load %arg5[%c0_12, %c0_13] : memref<1x256xf32, #tpu.memory_space<vmem>>, vector<1x256xf32>
    %25 = vector.broadcast %24 : vector<1x256xf32> to vector<8x256xf32>
    %26 = arith.addf %23, %25 : vector<8x256xf32>
    %cst_14 = arith.constant 2.000000e+01 : f32
    %27 = vector.broadcast %cst_14 : f32 to vector<8x256xf32>
    %28 = arith.minimumf %26, %27 : vector<8x256xf32>
    %29 = math.exp %28 : vector<8x256xf32>
    %cst_15 = arith.constant 2.000000e+00 : f32
    %30 = vector.broadcast %cst_15 : f32 to vector<8x256xf32>
    %31 = arith.addf %29, %30 : vector<8x256xf32>
    %32 = arith.mulf %29, %31 : vector<8x256xf32>
    %cst_16 = arith.constant 2.000000e+00 : f32
    %33 = vector.broadcast %cst_16 : f32 to vector<8x256xf32>
    %34 = arith.addf %32, %33 : vector<8x256xf32>
    %35 = tpu.reciprocal %34 {approx = true} : vector<8x256xf32> -> vector<8x256xf32>
    %36 = arith.mulf %26, %32 : vector<8x256xf32>
    %37 = arith.mulf %36, %35 : vector<8x256xf32>
    %cst_17 = arith.constant 2.000000e+01 : f32
    %38 = vector.broadcast %cst_17 : f32 to vector<8x256xf32>
    %39 = arith.cmpf ogt, %26, %38 : vector<8x256xf32>
    %40 = arith.select %39, %26, %37 : vector<8x256xi1>, vector<8x256xf32>
    %c0_18 = arith.constant 0 : index
    %c0_19 = arith.constant 0 : index
    %41 = vector.load %arg6[%c0_18, %c0_19] : memref<1x256xbf16, #tpu.memory_space<vmem>>, vector<1x256xbf16>
    %42 = arith.extf %41 : vector<1x256xbf16> to vector<1x256xf32>
    %43 = vector.broadcast %42 : vector<1x256xf32> to vector<8x256xf32>
    %44 = arith.mulf %40, %43 : vector<8x256xf32>
    %cst_20 = arith.constant dense<0.000000e+00> : vector<8xf32>
    %45 = vector.multi_reduction <add>, %44, %cst_20 [1] : vector<8x256xf32> to vector<8xf32>
    %46 = vector.shape_cast %45 : vector<8xf32> to vector<8x1xf32>
    %c0_21 = arith.constant 0 : index
    %47 = memref.load %arg7[%c0_21] : memref<1xf32, #tpu.memory_space<smem>>
    %48 = vector.broadcast %47 : f32 to vector<8x1xf32>
    %49 = arith.addf %46, %48 : vector<8x1xf32>
    %c0_22 = arith.constant 0 : index
    %c0_23 = arith.constant 0 : index
    %50 = vector.load %arg8[%c0_22, %c0_23] : memref<8x1xf32, #tpu.memory_space<vmem>>, vector<8x1xf32>
    tpu.vector_store %arg8[%c0_22, %c0_23], %49 {strides = array<i32>} : memref<8x1xf32, #tpu.memory_space<vmem>>, vector<8x1xf32>,
    return
  }
  func.func @transform_0(%arg0: i32) -> (i32, i32) {
    %c0_i32 = arith.constant 0 : i32
    %c0_i32_0 = arith.constant 0 : i32
    return %arg0, %c0_i32 : i32, i32
  }
  func.func @transform_1(%arg0: i32) -> (i32, i32) {
    %c0_i32 = arith.constant 0 : i32
    %c0_i32_0 = arith.constant 0 : i32
    %c0_i32_1 = arith.constant 0 : i32
    return %c0_i32, %c0_i32_0 : i32, i32
  }
  func.func @transform_2(%arg0: i32) -> (i32, i32) {
    %c0_i32 = arith.constant 0 : i32
    %c0_i32_0 = arith.constant 0 : i32
    %c0_i32_1 = arith.constant 0 : i32
    return %c0_i32, %c0_i32_0 : i32, i32
  }
  func.func @transform_3(%arg0: i32) -> (i32, i32) {
    %c0_i32 = arith.constant 0 : i32
    %c0_i32_0 = arith.constant 0 : i32
    %c0_i32_1 = arith.constant 0 : i32
    return %c0_i32, %c0_i32_0 : i32, i32
  }
  func.func @transform_4(%arg0: i32) -> (i32, i32) {
    %c0_i32 = arith.constant 0 : i32
    %c0_i32_0 = arith.constant 0 : i32
    %c0_i32_1 = arith.constant 0 : i32
    return %c0_i32, %c0_i32_0 : i32, i32
  }
  func.func @transform_5(%arg0: i32) -> (i32, i32) {
    %c0_i32 = arith.constant 0 : i32
    %c0_i32_0 = arith.constant 0 : i32
    %c0_i32_1 = arith.constant 0 : i32
    return %c0_i32, %c0_i32_0 : i32, i32
  }
  func.func @transform_6(%arg0: i32) -> i32 {
    %c0_i32 = arith.constant 0 : i32
    %c0_i32_0 = arith.constant 0 : i32
    return %c0_i32 : i32
  }
  func.func @transform_7(%arg0: i32) -> (i32, i32) {
    %c0_i32 = arith.constant 0 : i32
    %c0_i32_0 = arith.constant 0 : i32
    return %arg0, %c0_i32 : i32, i32
  }
}

</mosaic_0001>

<llo_original>
// kernel: critic_v_pallas.1
$region0: #{critic_v_pallas.1}
  #allocation0 [shape = 'u32[]', space=smem, size = 0x4, offset = 0x4, fixed_abs, tag = 'smem constant byte address 0x4 - core index']
  #allocation1 [shape = 'u32[144,128]{1,0:T(1,128)}', space=vmem, size = 0x12000, scoped, tag = 'internal scratch']
  #allocation2 [shape = 'f32[1]{0:T(128)S(6)}', space=smem, size = 0x200, scoped, tag = 'scoped memory for critic_v_pallas.1']
  %s0 = inlined_call_operand.vmem [shape: f32[2,8], index: 0, kind: input, shape index: {}]
  %s1 = inlined_call_operand.vmem [shape: bf16[8,256], index: 1, kind: input, shape index: {}]
  %s2 = inlined_call_operand.vmem [shape: f32[1,256], index: 2, kind: input, shape index: {}]
  %s3 = inlined_call_operand.vmem [shape: bf16[256,256], index: 3, kind: input, shape index: {}]
  %s4 = inlined_call_operand.vmem [shape: f32[1,256], index: 4, kind: input, shape index: {}]
  %s5 = inlined_call_operand.vmem [shape: bf16[1,256], index: 5, kind: input, shape index: {}]
  %s6 = inlined_call_operand.<no memory space> [shape: f32[1], index: 6, kind: input, shape index: {}]
  %s7 = inlined_call_operand.vmem [shape: f32[2,1], index: 7, kind: output, shape index: {}]
  %s8 = sld [smem:[#allocation0]]
  $region68: #{critic_v_pallas.1} parent=0
    _
  %s10 = ssub.s32 1, %s8
  %s11 = scalar_select 0, %s10, %s8
  %12 = sst [smem:[#allocation2]] %s6
  $region1: #{critic_v_pallas.1} parent=0
    #allocation3 [shape = 'u8[4096]{0}', space=vmem, size = 0x1000, scoped, tag = 'output window, operand 0, single buffered']
    // Predicated region
    $region2: #{critic_v_pallas.1} parent=1 // pred_check
      _
    $region3: #{critic_v_pallas.1} parent=1 // pred_check_branch
      %14 = sbr.rel (0) target = $region5
    $region4: #{critic_v_pallas.1} parent=1 // pred_region
      _
    $region5: #{critic_v_pallas.1} parent=1 // pred_fallthru
      _
    // Predicated region
    $region6: #{critic_v_pallas.1} parent=1 // pred_check
      _
    $region7: #{critic_v_pallas.1} parent=1 // pred_check_branch
      %16 = sbr.rel (0) target = $region9
    $region8: #{critic_v_pallas.1} parent=1 // pred_region
      _
    $region9: #{critic_v_pallas.1} parent=1 // pred_fallthru
      _
    // Predicated region
    $region10: #{critic_v_pallas.1} parent=1 // pred_check
      _
    $region11: #{critic_v_pallas.1} parent=1 // pred_check_branch
      %18 = sbr.rel (0) target = $region13
    $region12: #{critic_v_pallas.1} parent=1 // pred_region
      _
    $region13: #{critic_v_pallas.1} parent=1 // pred_fallthru
      _
    // Predicated region
    $region14: #{critic_v_pallas.1} parent=1 // pred_check
      _
    $region15: #{critic_v_pallas.1} parent=1 // pred_check_branch
      %20 = sbr.rel (0) target = $region17
    $region16: #{critic_v_pallas.1} parent=1 // pred_region
      _
    $region17: #{critic_v_pallas.1} parent=1 // pred_fallthru
      _
    // Predicated region
    $region18: #{critic_v_pallas.1} parent=1 // pred_check
      _
    $region19: #{critic_v_pallas.1} parent=1 // pred_check_branch
      %22 = sbr.rel (0) target = $region21
    $region20: #{critic_v_pallas.1} parent=1 // pred_region
      _
    $region21: #{critic_v_pallas.1} parent=1 // pred_fallthru
      _
    // Predicated region
    $region22: #{critic_v_pallas.1} parent=1 // pred_check
      _
    $region23: #{critic_v_pallas.1} parent=1 // pred_check_branch
      %24 = sbr.rel (0) target = $region25
    $region24: #{critic_v_pallas.1} parent=1 // pred_region
      _
    $region25: #{critic_v_pallas.1} parent=1 // pred_fallthru
      _
    // Predicated region
    $region26: #{critic_v_pallas.1} parent=1 // pred_check
      _
    $region27: #{critic_v_pallas.1} parent=1 // pred_check_branch
      %26 = sbr.rel (0) target = $region29
    $region28: #{critic_v_pallas.1} parent=1 // pred_region
      _
    $region29: #{critic_v_pallas.1} parent=1 // pred_fallthru
      _
    %v28 = vld [vmem:[%s0] sm:$0xff]
    %v29 = vpack.c.bf16 %v28, %v28
    %v30 = vld [vmem:[%s1] sm:$0xff]
    %v31 = vld [vmem:[%s2] sm:$0x3]
    %v33 = vlaneseq
    %v34 = vshrl.u32 %v33, 7
    %v35 = vsub.s32 0, %v34
    %v36 = vrot.slane %v31, %v35
    %v37 = vlaneseq
    %v38 = vshrl.u32 %v37, 7
    %v39 = vsub.s32 1, %v38
    %v40 = vrot.slane %v31, %v39
    %v44 = vunpack.c.l.b16 %v30
    %v45 = vunpack.c.h.b16 %v30
    %v46 = vpack.c.b16 %v44, %v44
    %v47 = vpack.c.b16 %v45, %v45
    %vm48 = vcmask 64512
    %v50 = vsel %vm48, %v29, 0
    %vm52 = vcmask 1043456
    %v54 = vsel %vm52, %v46, 0
    %v57 = vsel %vm52, %v47, 0
    %59 = vmatprep.subr.bf16.mxu0 %v57
    %60 = vmatpush1.bf16.msra.mxu0 %v54
    %61 = vmatprep.subr.bf16.mxu0 0
    %62 = vmatpush1.bf16.msra.mxu0 0
    %63 = vmatprep.subr.bf16.mxu0 0
    %64 = vmatpush1.bf16.msra.mxu0 0
    %65 = vmatprep.subr.bf16.mxu0 0
    %66 = vmatpush1.bf16.msra.mxu0 0
    %67 = vmatprep.subr.bf16.mxu0 0
    %68 = vmatpush1.bf16.msra.mxu0 0
    %69 = vmatprep.subr.bf16.mxu0 0
    %70 = vmatpush1.bf16.msra.mxu0 0
    %71 = vmatprep.subr.bf16.mxu0 0
    %72 = vmatpush1.bf16.msra.mxu0 0
    %73 = vmatprep.subr.bf16.mxu0 0
    %74 = vmatpush1.bf16.msra.mxu0 0
    %75 = vmatprep.subr.bf16.mxu0 0
    %76 = vmatpush1.bf16.msra.mxu0 0
    %77 = vmatprep.subr.bf16.mxu0 0
    %78 = vmatpush1.bf16.msra.mxu0 0
    %79 = vmatprep.subr.bf16.mxu0 0
    %80 = vmatpush1.bf16.msra.mxu0 0
    %81 = vmatprep.subr.bf16.mxu0 0
    %82 = vmatpush1.bf16.msra.mxu0 0
    %83 = vmatprep.subr.bf16.mxu0 0
    %84 = vmatpush1.bf16.msra.mxu0 0
    %85 = vmatprep.subr.bf16.mxu0 0
    %86 = vmatpush1.bf16.msra.mxu0 0
    %87 = vmatprep.subr.bf16.mxu0 0
    %88 = vmatpush1.bf16.msra.mxu0 0
    %89 = vmatprep.subr.bf16.mxu0 0
    %90 = vmatpush1.bf16.msra.mxu0 0
    %91 = vmatprep.mubr.bf16.mxu0 0
    %92 = vmatmul.mubr.bf16.gmra.mrb[0].mxu0 %v50
    %v93 = vpop.f32.mrb[0].mxu0
    %v94 = vadd.f32 %v36, %v93
    %v95 = vpop.f32.mrb[0].mxu0
    %v96 = vadd.f32 %v40, %v95
    %v97 = vpop.f32.mrb[0].mxu0
    %v98 = vpop.f32.mrb[0].mxu0
    %99 = vdwg.mxu0
    %v100 = vmin.f32 %v94, 20.0
    %v101 = vmin.f32 %v96, 20.0
    %v102 = vmul.f32 %v100, 1.442695
    %v103 = vpow.pop %v102
    %v104 = vmul.f32 %v101, 1.442695
    %v105 = vpow.pop %v104
    %v106 = vadd.f32 %v103, 2.0
    %v107 = vadd.f32 %v105, 2.0
    %v108 = vmul.f32 %v103, %v106
    %v109 = vmul.f32 %v105, %v107
    %v110 = vadd.f32 %v108, 2.0
    %v111 = vadd.f32 %v109, 2.0
    %v112 = vrcp.pop %v110
    %v113 = vrcp.pop %v111
    %v114 = vmul.f32 %v94, %v108
    %v115 = vmul.f32 %v96, %v109
    %v116 = vmul.f32 %v114, %v112
    %v117 = vmul.f32 %v115, %v113
    %vm118 = vcmp.gt.f32.partialorder %v94, 20.0
    %vm119 = vcmp.gt.f32.partialorder %v96, 20.0
    %v120 = vsel %vm118, %v94, %v116
    %v121 = vsel %vm119, %v96, %v117
    %v122 = vpack.c.bf16 %v120, %v120
    %v123 = vpack.c.bf16 %v121, %v121
    %v124 = vld [vmem:[%s3] sm:$0xff]
    %v125 = vld [vmem:[%s3 + $0x8] sm:$0xff]
    %v126 = vld [vmem:[%s3 + $0x10] sm:$0xff]
    %v127 = vld [vmem:[%s3 + $0x18] sm:$0xff]
    %v128 = vld [vmem:[%s3 + $0x20] sm:$0xff]
    %v129 = vld [vmem:[%s3 + $0x28] sm:$0xff]
    %v130 = vld [vmem:[%s3 + $0x30] sm:$0xff]
    %v131 = vld [vmem:[%s3 + $0x38] sm:$0xff]
    %v132 = vld [vmem:[%s3 + $0x40] sm:$0xff]
    %v133 = vld [vmem:[%s3 + $0x48] sm:$0xff]
    %v134 = vld [vmem:[%s3 + $0x50] sm:$0xff]
    %v135 = vld [vmem:[%s3 + $0x58] sm:$0xff]
    %v136 = vld [vmem:[%s3 + $0x60] sm:$0xff]
    %v137 = vld [vmem:[%s3 + $0x68] sm:$0xff]
    %v138 = vld [vmem:[%s3 + $0x70] sm:$0xff]
    %v139 = vld [vmem:[%s3 + $0x78] sm:$0xff]
    %v140 = vld [vmem:[%s3 + $0x80] sm:$0xff]
    %v141 = vld [vmem:[%s3 + $0x88] sm:$0xff]
    %v142 = vld [vmem:[%s3 + $0x90] sm:$0xff]
    %v143 = vld [vmem:[%s3 + $0x98] sm:$0xff]
    %v144 = vld [vmem:[%s3 + $0xa0] sm:$0xff]
    %v145 = vld [vmem:[%s3 + $0xa8] sm:$0xff]
    %v146 = vld [vmem:[%s3 + $0xb0] sm:$0xff]
    %v147 = vld [vmem:[%s3 + $0xb8] sm:$0xff]
    %v148 = vld [vmem:[%s3 + $0xc0] sm:$0xff]
    %v149 = vld [vmem:[%s3 + $0xc8] sm:$0xff]
    %v150 = vld [vmem:[%s3 + $0xd0] sm:$0xff]
    %v151 = vld [vmem:[%s3 + $0xd8] sm:$0xff]
    %v152 = vld [vmem:[%s3 + $0xe0] sm:$0xff]
    %v153 = vld [vmem:[%s3 + $0xe8] sm:$0xff]
    %v154 = vld [vmem:[%s3 + $0xf0] sm:$0xff]
    %v155 = vld [vmem:[%s3 + $0xf8] sm:$0xff]
    %v156 = vld [vmem:[%s4] sm:$0x3]
    %v158 = vlaneseq
    %v159 = vshrl.u32 %v158, 7
    %v160 = vsub.s32 0, %v159
    %v161 = vrot.slane %v156, %v160
    %v162 = vlaneseq
    %v163 = vshrl.u32 %v162, 7
    %v164 = vsub.s32 1, %v163
    %v165 = vrot.slane %v156, %v164
    %v200 = vunpack.c.l.b16 %v124
    %v201 = vunpack.c.h.b16 %v124
    %v202 = vunpack.c.l.b16 %v125
    %v203 = vunpack.c.h.b16 %v125
    %v204 = vunpack.c.l.b16 %v126
    %v205 = vunpack.c.h.b16 %v126
    %v206 = vunpack.c.l.b16 %v127
    %v207 = vunpack.c.h.b16 %v127
    %v208 = vunpack.c.l.b16 %v128
    %v209 = vunpack.c.h.b16 %v128
    %v210 = vunpack.c.l.b16 %v129
    %v211 = vunpack.c.h.b16 %v129
    %v212 = vunpack.c.l.b16 %v130
    %v213 = vunpack.c.h.b16 %v130
    %v214 = vunpack.c.l.b16 %v131
    %v215 = vunpack.c.h.b16 %v131
    %v216 = vunpack.c.l.b16 %v132
    %v217 = vunpack.c.h.b16 %v132
    %v218 = vunpack.c.l.b16 %v133
    %v219 = vunpack.c.h.b16 %v133
    %v220 = vunpack.c.l.b16 %v134
    %v221 = vunpack.c.h.b16 %v134
    %v222 = vunpack.c.l.b16 %v135
    %v223 = vunpack.c.h.b16 %v135
    %v224 = vunpack.c.l.b16 %v136
    %v225 = vunpack.c.h.b16 %v136
    %v226 = vunpack.c.l.b16 %v137
    %v227 = vunpack.c.h.b16 %v137
    %v228 = vunpack.c.l.b16 %v138
    %v229 = vunpack.c.h.b16 %v138
    %v230 = vunpack.c.l.b16 %v139
    %v231 = vunpack.c.h.b16 %v139
    %v232 = vunpack.c.l.b16 %v140
    %v233 = vunpack.c.h.b16 %v140
    %v234 = vunpack.c.l.b16 %v141
    %v235 = vunpack.c.h.b16 %v141
    %v236 = vunpack.c.l.b16 %v142
    %v237 = vunpack.c.h.b16 %v142
    %v238 = vunpack.c.l.b16 %v143
    %v239 = vunpack.c.h.b16 %v143
    %v240 = vunpack.c.l.b16 %v144
    %v241 = vunpack.c.h.b16 %v144
    %v242 = vunpack.c.l.b16 %v145
    %v243 = vunpack.c.h.b16 %v145
    %v244 = vunpack.c.l.b16 %v146
    %v245 = vunpack.c.h.b16 %v146
    %v246 = vunpack.c.l.b16 %v147
    %v247 = vunpack.c.h.b16 %v147
    %v248 = vunpack.c.l.b16 %v148
    %v249 = vunpack.c.h.b16 %v148
    %v250 = vunpack.c.l.b16 %v149
    %v251 = vunpack.c.h.b16 %v149
    %v252 = vunpack.c.l.b16 %v150
    %v253 = vunpack.c.h.b16 %v150
    %v254 = vunpack.c.l.b16 %v151
    %v255 = vunpack.c.h.b16 %v151
    %v256 = vunpack.c.l.b16 %v152
    %v257 = vunpack.c.h.b16 %v152
    %v258 = vunpack.c.l.b16 %v153
    %v259 = vunpack.c.h.b16 %v153
    %v260 = vunpack.c.l.b16 %v154
    %v261 = vunpack.c.h.b16 %v154
    %v262 = vunpack.c.l.b16 %v155
    %v263 = vunpack.c.h.b16 %v155
    %v264 = vpack.c.b16 %v202, %v200
    %v265 = vpack.c.b16 %v203, %v201
    %v266 = vpack.c.b16 %v206, %v204
    %v267 = vpack.c.b16 %v207, %v205
    %v268 = vpack.c.b16 %v210, %v208
    %v269 = vpack.c.b16 %v211, %v209
    %v270 = vpack.c.b16 %v214, %v212
    %v271 = vpack.c.b16 %v215, %v213
    %v272 = vpack.c.b16 %v218, %v216
    %v273 = vpack.c.b16 %v219, %v217
    %v274 = vpack.c.b16 %v222, %v220
    %v275 = vpack.c.b16 %v223, %v221
    %v276 = vpack.c.b16 %v226, %v224
    %v277 = vpack.c.b16 %v227, %v225
    %v278 = vpack.c.b16 %v230, %v228
    %v279 = vpack.c.b16 %v231, %v229
    %v280 = vpack.c.b16 %v234, %v232
    %v281 = vpack.c.b16 %v235, %v233
    %v282 = vpack.c.b16 %v238, %v236
    %v283 = vpack.c.b16 %v239, %v237
    %v284 = vpack.c.b16 %v242, %v240
    %v285 = vpack.c.b16 %v243, %v241
    %v286 = vpack.c.b16 %v246, %v244
    %v287 = vpack.c.b16 %v247, %v245
    %v288 = vpack.c.b16 %v250, %v248
    %v289 = vpack.c.b16 %v251, %v249
    %v290 = vpack.c.b16 %v254, %v252
    %v291 = vpack.c.b16 %v255, %v253
    %v292 = vpack.c.b16 %v258, %v256
    %v293 = vpack.c.b16 %v259, %v257
    %v294 = vpack.c.b16 %v262, %v260
    %v295 = vpack.c.b16 %v263, %v261
    %328 = vmatprep.subr.bf16.mxu0 %v265
    %329 = vmatpush1.bf16.msra.mxu0 %v264
    %330 = vmatprep.subr.bf16.mxu0 %v267
    %331 = vmatpush1.bf16.msra.mxu0 %v266
    %332 = vmatprep.subr.bf16.mxu0 %v269
    %333 = vmatpush1.bf16.msra.mxu0 %v268
    %334 = vmatprep.subr.bf16.mxu0 %v271
    %335 = vmatpush1.bf16.msra.mxu0 %v270
    %336 = vmatprep.subr.bf16.mxu0 %v273
    %337 = vmatpush1.bf16.msra.mxu0 %v272
    %338 = vmatprep.subr.bf16.mxu0 %v275
    %339 = vmatpush1.bf16.msra.mxu0 %v274
    %340 = vmatprep.subr.bf16.mxu0 %v277
    %341 = vmatpush1.bf16.msra.mxu0 %v276
    %342 = vmatprep.subr.bf16.mxu0 %v279
    %343 = vmatpush1.bf16.msra.mxu0 %v278
    %344 = vmatprep.subr.bf16.mxu0 %v281
    %345 = vmatpush1.bf16.msra.mxu0 %v280
    %346 = vmatprep.subr.bf16.mxu0 %v283
    %347 = vmatpush1.bf16.msra.mxu0 %v282
    %348 = vmatprep.subr.bf16.mxu0 %v285
    %349 = vmatpush1.bf16.msra.mxu0 %v284
    %350 = vmatprep.subr.bf16.mxu0 %v287
    %351 = vmatpush1.bf16.msra.mxu0 %v286
    %352 = vmatprep.subr.bf16.mxu0 %v289
    %353 = vmatpush1.bf16.msra.mxu0 %v288
    %354 = vmatprep.subr.bf16.mxu0 %v291
    %355 = vmatpush1.bf16.msra.mxu0 %v290
    %356 = vmatprep.subr.bf16.mxu0 %v293
    %357 = vmatpush1.bf16.msra.mxu0 %v292
    %358 = vmatprep.subr.bf16.mxu0 %v295
    %359 = vmatpush1.bf16.msra.mxu0 %v294
    %360 = vmatprep.mubr.bf16.mxu0 %v123
    %361 = vmatmul.mubr.bf16.gmra.mrb[0].mxu0 %v122
    %v362 = vpop.f32.mrb[0].mxu0
    %v363 = vadd.f32 %v161, %v362
    %v364 = vpop.f32.mrb[0].mxu0
    %v365 = vadd.f32 %v165, %v364
    %v366 = vpop.f32.mrb[0].mxu0
    %v367 = vpop.f32.mrb[0].mxu0
    %368 = vdwg.mxu0
    %v369 = vmin.f32 %v363, 20.0
    %v370 = vmin.f32 %v365, 20.0
    %v371 = vmul.f32 %v369, 1.442695
    %v372 = vpow.pop %v371
    %v373 = vmul.f32 %v370, 1.442695
    %v374 = vpow.pop %v373
    %v375 = vadd.f32 %v372, 2.0
    %v376 = vadd.f32 %v374, 2.0
    %v377 = vmul.f32 %v372, %v375
    %v378 = vmul.f32 %v374, %v376
    %v379 = vadd.f32 %v377, 2.0
    %v380 = vadd.f32 %v378, 2.0
    %v381 = vrcp.pop %v379
    %v382 = vrcp.pop %v380
    %v383 = vmul.f32 %v363, %v377
    %v384 = vmul.f32 %v365, %v378
    %v385 = vmul.f32 %v383, %v381
    %v386 = vmul.f32 %v384, %v382
    %vm387 = vcmp.gt.f32.partialorder %v363, 20.0
    %vm388 = vcmp.gt.f32.partialorder %v365, 20.0
    %v389 = vsel %vm387, %v363, %v385
    %v390 = vsel %vm388, %v365, %v386
    %v391 = vld [vmem:[%s5] sm:$0x3]
    %v392 = vunpack.c.l.bf16 %v391
    %v394 = vlaneseq
    %v395 = vshrl.u32 %v394, 7
    %v396 = vsub.s32 0, %v395
    %v397 = vrot.slane %v392, %v396
    %v398 = vlaneseq
    %v399 = vshrl.u32 %v398, 7
    %v400 = vsub.s32 2, %v399
    %v401 = vrot.slane %v392, %v400
    %v404 = vlaneseq
    %v405 = vshrl.u32 %v404, 7
    %v406 = vsub.s32 0, %v405
    %v407 = vrot.slane %v397, %v406
    %v408 = vlaneseq
    %v409 = vshrl.u32 %v408, 7
    %v410 = vsub.s32 0, %v409
    %v411 = vrot.slane %v401, %v410
    %v412 = vmul.f32 %v389, %v407
    %v413 = vmul.f32 %v390, %v411
    %v414 = vadd.f32 %v412, %v413
    %415 = vadd.xlane.f32.xlu0 %v414
    %v416 = vpop.xlane.xlu0 %415
    %s417 = sld [smem:[#allocation2]]
    %v418 = vstv %s417
    %v419 = vadd.f32 %v416, %v418
    %vm420 = vcmask 7168
    %421 = vst.msk [vmem:[#allocation3] sm:$0xff] %vm420, %v419
    // Predicated region
    $region30: #{critic_v_pallas.1} parent=1 // pred_check
      _
    $region31: #{critic_v_pallas.1} parent=1 // pred_check_branch
      %423 = sbr.rel (0) target = $region33
    $region32: #{critic_v_pallas.1} parent=1 // pred_region
      // Predicated region
      $region34: #{critic_v_pallas.1} parent=32 // pred_check
        _
      $region35: #{critic_v_pallas.1} parent=32 // pred_check_branch
        %425 = sbr.rel (0) target = $region37
      $region36: #{critic_v_pallas.1} parent=32 // pred_region
        // Predicated region
        $region38: #{critic_v_pallas.1} parent=36 // pred_check
          _
        $region39: #{critic_v_pallas.1} parent=36 // pred_check_branch
          %427 = sbr.rel target = $region41
        $region40: #{critic_v_pallas.1} parent=36 // pred_region
          // Predicated region
          $region53: #{critic_v_pallas.1} parent=40 // pred_check
            _
          $region54: #{critic_v_pallas.1} parent=40 // pred_check_branch
            %442 = sbr.rel (0) target = $region56
          $region55: #{critic_v_pallas.1} parent=40 // pred_region
            loop: start=0, step=1, limit=1
            $region57: #{critic_v_pallas.1} parent=55 // loop_pre_header
              _
            $region58: #{critic_v_pallas.1} parent=55 // loop_header
              %s445 = sphi 0, %s449
              %p446 = scmp.ge.s32.totalorder %s445, 1
              %s450 = sphi [#allocation3], [#allocation3]
              %s451 = sphi %s7, %s7
            $region59: #{critic_v_pallas.1} parent=55 // loop_header_branch
              %448 = sbr.rel (%p446) target = $region63
            $region60: #{critic_v_pallas.1} parent=55 // loop_body
              %v452 = vld [vmem:[%s450] sm:$0x3]
              %453 = vst [vmem:[%s451] sm:$0x3] %v452
            $region61: #{critic_v_pallas.1} parent=55 // loop_footer
              %s449 = sadd.s32 1, %s445
            $region62: #{critic_v_pallas.1} parent=55 // loop_footer_branch
              %444 = sbr.rel target = $region58
            $region63: #{critic_v_pallas.1} parent=55 // loop_exit
              _
          $region56: #{critic_v_pallas.1} parent=40 // pred_fallthru
            _
        $region41: #{critic_v_pallas.1} parent=36 // pred_fallthru
          _
        // Predicated region
        $region42: #{critic_v_pallas.1} parent=36 // pred_check
          _
        $region43: #{critic_v_pallas.1} parent=36 // pred_check_branch
          %429 = sbr.rel (0) target = $region45
        $region44: #{critic_v_pallas.1} parent=36 // pred_region
          loop: start=0, step=1, limit=1
          $region46: #{critic_v_pallas.1} parent=44 // loop_pre_header
            _
          $region47: #{critic_v_pallas.1} parent=44 // loop_header
            %s432 = sphi 0, %s436
            %p433 = scmp.ge.s32.totalorder %s432, 1
            %s437 = sphi [#allocation3], [#allocation3]
            %s438 = sphi %s7, %s7
          $region48: #{critic_v_pallas.1} parent=44 // loop_header_branch
            %435 = sbr.rel (%p433) target = $region52
          $region49: #{critic_v_pallas.1} parent=44 // loop_body
            %v439 = vld [vmem:[%s437] sm:$0x3]
            %440 = vst [vmem:[%s438] sm:$0x3] %v439
          $region50: #{critic_v_pallas.1} parent=44 // loop_footer
            %s436 = sadd.s32 1, %s432
          $region51: #{critic_v_pallas.1} parent=44 // loop_footer_branch
            %431 = sbr.rel target = $region47
          $region52: #{critic_v_pallas.1} parent=44 // loop_exit
            _
        $region45: #{critic_v_pallas.1} parent=36 // pred_fallthru
          _
      $region37: #{critic_v_pallas.1} parent=32 // pred_fallthru
        _
      %454 = vnop
    $region33: #{critic_v_pallas.1} parent=1 // pred_fallthru
      _
    // Predicated region
    $region64: #{critic_v_pallas.1} parent=1 // pred_check
      _
    $region65: #{critic_v_pallas.1} parent=1 // pred_check_branch
      %456 = sbr.rel (0) target = $region67
    $region66: #{critic_v_pallas.1} parent=1 // pred_region
      _
    $region67: #{critic_v_pallas.1} parent=1 // pred_fallthru
      _

</llo_original>
